<compile_context>
chip_gen: v6e
topology: v6e:2x2x1
jax: 0.10.0
libtpu: 0.0.40
codegen_flags: <defaults>
</compile_context>

<pallas_src>
import math

import jax
import jax.numpy as jnp
from jax.experimental import pallas as pl
from jax.experimental.pallas import tpu as pltpu

_LANES = 128
_TILE_BYTES_BUDGET = 4 * 1024 * 1024  # ~4 MiB/tile: 4 bufs * 4 MiB << 32 MiB scoped VMEM (v7x-safe)


def _identity_copy_kernel(x_ref, o_ref):
    # Abstract forward -> identity on the lane-dense tile held in VMEM.
    o_ref[...] = x_ref[...]


def _choose_row_tile(rows: int, cols: int, itemsize: int) -> int:
    """Largest layout-legal row tile that fits the per-tile VMEM budget."""
    # Sublane granularity for sub-tiling: 8 rows for f32, 16 for bf16, 32 for 8-bit.
    sublane = max(8, 32 // max(1, itemsize))
    budget_rows = max(sublane, _TILE_BYTES_BUDGET // max(1, cols * itemsize))
    budget_rows = (budget_rows // sublane) * sublane
    if rows <= budget_rows or rows % sublane != 0:
        # Whole array in a single block (always legal: block dims == array dims).
        return rows
    return budget_rows


def base_model_forward(node_feature: jax.Array) -> jax.Array:
    """Pallas implementation of BaseModel.forward (abstract -> identity)."""
    orig_shape = node_feature.shape
    total = math.prod(orig_shape)
    itemsize = jnp.dtype(node_feature.dtype).itemsize

    # Lane-dense presentation: last dim a multiple of 128 whenever possible.
    if total % _LANES == 0:
        x2d = node_feature.reshape(total // _LANES, _LANES)
    else:
        # Fallback: keep the original feature dim on the lane axis.
        x2d = node_feature.reshape(-1, orig_shape[-1])
    rows, cols = x2d.shape

    row_tile = _choose_row_tile(rows, cols, itemsize)
    grid_steps = pl.cdiv(rows, row_tile)

    out2d = pl.pallas_call(
        _identity_copy_kernel,
        out_shape=jax.ShapeDtypeStruct((rows, cols), x2d.dtype),
        grid=(grid_steps,),
        in_specs=[pl.BlockSpec((row_tile, cols), lambda i: (i, 0))],
        out_specs=pl.BlockSpec((row_tile, cols), lambda i: (i, 0)),
        # Identity: let the output alias the input buffer (no extra HBM
        # allocation / round trip beyond the unavoidable tile copy).
        input_output_aliases={0: 0},
        compiler_params=pltpu.CompilerParams(
            dimension_semantics=("parallel",),
        ),
    )(x2d)

    return out2d.reshape(orig_shape)


if __name__ == "__main__":
    key = jax.random.PRNGKey(0)
    # Small shapes consistent with a BNT-style node-feature tensor:
    # batch=2, num_nodes=8, feature_dim=32.
    node_feature = jax.random.normal(key, (2, 8, 32), dtype=jnp.float32)

    out = base_model_forward(node_feature)
    out = jax.block_until_ready(out)

    # Sanity check: abstract forward implemented as identity.
    assert out.shape == node_feature.shape
    assert out.dtype == node_feature.dtype
    assert bool(jnp.allclose(out, node_feature))

    print("KERNEL_OK")
</pallas_src>

<mosaic_0001>
module attributes {stable_mosaic.version = 11 : i64} {
  func.func @_identity_copy_kernel(%arg0: i32, %arg1: memref<4x128xf32, #tpu.memory_space<vmem>>, %arg2: memref<4x128xf32, #tpu.memory_space<vmem>>) attributes {dimension_semantics = [#tpu.dimension_semantics<parallel>], iteration_bounds = array<i64: 1>, scalar_prefetch = 0 : i64, scratch_operands = 0 : i64, tpu.core_type = #tpu.core_type<tc>, window_params = [{transform_indices = @transform_0, window_bounds = array<i64: 4, 128>}, {transform_indices = @transform_1, window_bounds = array<i64: 4, 128>}]} {
    %c0 = arith.constant 0 : index
    %c0_0 = arith.constant 0 : index
    %0 = vector.load %arg1[%c0, %c0_0] : memref<4x128xf32, #tpu.memory_space<vmem>>, vector<4x128xf32>
    %c0_1 = arith.constant 0 : index
    %c0_2 = arith.constant 0 : index
    %1 = vector.load %arg2[%c0_1, %c0_2] : memref<4x128xf32, #tpu.memory_space<vmem>>, vector<4x128xf32>
    tpu.vector_store %arg2[%c0_1, %c0_2], %0 {strides = array<i32>} : memref<4x128xf32, #tpu.memory_space<vmem>>, vector<4x128xf32>,
    return
  }
  func.func @transform_0(%arg0: i32) -> (i32, i32) {
    %c0_i32 = arith.constant 0 : i32
    %c0_i32_0 = arith.constant 0 : i32
    return %arg0, %c0_i32 : i32, i32
  }
  func.func @transform_1(%arg0: i32) -> (i32, i32) {
    %c0_i32 = arith.constant 0 : i32
    %c0_i32_0 = arith.constant 0 : i32
    return %arg0, %c0_i32 : i32, i32
  }
}

</mosaic_0001>

<llo_original>
// kernel: tpu_custom_call.1
$region0: #{tpu_custom_call.1}
  #allocation0 [shape = 'u32[]', space=smem, size = 0x4, offset = 0x4, fixed_abs, tag = 'smem constant byte address 0x4 - core index']
  #allocation1 [shape = 'u32[144,128]{1,0:T(1,128)}', space=vmem, size = 0x12000, scoped, tag = 'internal scratch']
  %s0 = inlined_call_operand.hbm [shape: f32[4,128], index: 0, kind: input, shape index: {}, may-alias: {0,1}]
  %s1 = inlined_call_operand.hbm [shape: f32[4,128], index: 1, kind: output, shape index: {}, may-alias: {0,1}]
  %s2 = sld [smem:[#allocation0]]
  $region18: #{tpu_custom_call.1} parent=0
    _
  %s4 = ssub.s32 1, %s2
  %s5 = scalar_select 0, %s4, %s2
  $region1: #{tpu_custom_call.1} parent=0
    #allocation2 [shape = 'u8[2048]{0}', space=vmem, size = 0x800, scoped, tag = 'input window, operand 0, single buffered']
    #allocation3 [shape = 's32[1]{0}', space=sflag, size = 0x4, scoped, tag = 'scoped memory for tpu_custom_call.1']
    #allocation4 [shape = 's32[1]{0}', space=sflag, size = 0x4, scoped, tag = 'scoped memory for tpu_custom_call.1']
    #allocation5 [shape = 'u8[2048]{0}', space=vmem, size = 0x800, scoped, tag = 'output window, operand 0, single buffered']
    %6 = vsyncpa [#allocation3], 0
    %7 = vsyncpa [#allocation4], 0
    // Predicated region
    $region2: #{tpu_custom_call.1} parent=1 // pred_check
      _
    $region3: #{tpu_custom_call.1} parent=1 // pred_check_branch
      %9 = sbr.rel (0) target = $region5
    $region4: #{tpu_custom_call.1} parent=1 // pred_region
      %s11 = ssub.s32 64, 64
      %12 = vsyncadd [#allocation3], %s11
      %s14 = sshll.u32 [#allocation2], 4
      %s15 = int_to_ptr.vmem [resolvable:$true] %s14
      %17 = dma.hbm_to_vmem [thread:$0]  %s0, 64, %s15, [#allocation3]
    $region5: #{tpu_custom_call.1} parent=1 // pred_fallthru
      _
    // Predicated region
    $region6: #{tpu_custom_call.1} parent=1 // pred_check
      _
    $region7: #{tpu_custom_call.1} parent=1 // pred_check_branch
      %19 = sbr.rel (0) target = $region9
    $region8: #{tpu_custom_call.1} parent=1 // pred_region
      %20 = dma.done [#allocation3], 64
    $region9: #{tpu_custom_call.1} parent=1 // pred_fallthru
      _
    %v21 = vld [vmem:[#allocation2] sm:$0xf]
    %22 = vst [vmem:[#allocation5] sm:$0xf] %v21
    // Predicated region
    $region10: #{tpu_custom_call.1} parent=1 // pred_check
      _
    $region11: #{tpu_custom_call.1} parent=1 // pred_check_branch
      %24 = sbr.rel (0) target = $region13
    $region12: #{tpu_custom_call.1} parent=1 // pred_region
      %s26 = ssub.s32 64, 64
      %27 = vsyncadd [#allocation4], %s26
      %s29 = sshll.u32 [#allocation5], 4
      %s30 = int_to_ptr.vmem [resolvable:$true] %s29
      %32 = dma.vmem_to_hbm [thread:$0]  %s30, 64, %s1, [#allocation4]
    $region13: #{tpu_custom_call.1} parent=1 // pred_fallthru
      _
    // Predicated region
    $region14: #{tpu_custom_call.1} parent=1 // pred_check
      _
    $region15: #{tpu_custom_call.1} parent=1 // pred_check_branch
      %34 = sbr.rel (0) target = $region17
    $region16: #{tpu_custom_call.1} parent=1 // pred_region
      %35 = dma.done [#allocation4], 64
    $region17: #{tpu_custom_call.1} parent=1 // pred_fallthru
      _
    %36 = vsyncpa [#allocation3], 1
    %37 = vsyncpa [#allocation4], 1

</llo_original>
